<compile_context>
chip_gen: v7x
topology: tpu7x:2x2x1
jax: 0.10.0
libtpu: 0.0.40
codegen_flags: <defaults>
</compile_context>

<pallas_src>
import functools

import jax
import jax.numpy as jnp
from jax.experimental import pallas as pl
from jax.experimental.pallas import tpu as pltpu


def _attention_kernel(x_ref, wqkv_ref, wout_ref, o_ref, *, heads, dim_head):
    """One grid step = one block of samples.

    x_ref    : [block_b, n, dim]
    wqkv_ref : [dim, 3*inner]   (Q columns pre-scaled by dim_head**-0.5)
    wout_ref : [inner, dim]
    o_ref    : [block_b, n, dim]
    """
    inner = heads * dim_head

    x = x_ref[...]                                   # [bb, n, dim] (f32, no up-cast)
    w_qkv = wqkv_ref[...]                            # [dim, 3*inner]

    # QKV projection for the whole sample block at once: the MXU sees
    # block_b * n rows (instead of n), so the matmul M dimension is filled.
    qkv = jax.lax.dot_general(
        x, w_qkv, (((2,), (0,)), ((), ())),
        preferred_element_type=jnp.float32)          # [bb, n, 3*inner]

    acc = jnp.zeros(o_ref.shape, jnp.float32)        # f32 output accumulator
    for h in range(heads):                           # heads: small static int -> unrolled
        q = qkv[..., h * dim_head:(h + 1) * dim_head]                       # [bb, n, dh]
        k = qkv[..., inner + h * dim_head: inner + (h + 1) * dim_head]      # [bb, n, dh]
        v = qkv[..., 2 * inner + h * dim_head: 2 * inner + (h + 1) * dim_head]

        # Scores: contract the last dim of q and k directly (batched over samples);
        # no explicit kh.T, so no XLU transpose per head. Scale already folded into Wq.
        dots = jax.lax.dot_general(
            q, k, (((2,), (2,)), ((0,), (0,))),
            preferred_element_type=jnp.float32)      # [bb, n, n]

        # Numerically-stable softmax; normalization via approx reciprocal (EUP slot).
        dots = dots - jnp.max(dots, axis=-1, keepdims=True)
        e = jnp.exp(dots)
        denom = jnp.sum(e, axis=-1, keepdims=True)
        attn = e * pl.reciprocal(denom, approx=True)

        ctx = jax.lax.dot_general(
            attn, v, (((2,), (1,)), ((0,), (0,))),
            preferred_element_type=jnp.float32)      # [bb, n, dh]

        # Accumulate the output projection per head: static sublane slice of Wout,
        # pure MXU work, no lane-axis concatenation of head outputs.
        w_out_h = wout_ref[h * dim_head:(h + 1) * dim_head, :]              # [dh, dim]
        acc = acc + jax.lax.dot_general(
            ctx, w_out_h, (((2,), (0,)), ((), ())),
            preferred_element_type=jnp.float32)      # [bb, n, dim]

    o_ref[...] = acc.astype(o_ref.dtype)


def _pick_block_b(batch, seq, max_rows=256):
    """Largest divisor of `batch` keeping block_b * seq <= max_rows."""
    best = 1
    for d in range(1, batch + 1):
        if batch % d == 0 and d * seq <= max_rows:
            best = d
    return best


def attention_forward_batched(xb, w_qkv, w_out, *, heads, dim_head, block_b=None):
    """xb: [B, n, dim] -> [B, n, dim].  Each sample is processed independently
    (identical to calling Attention.forward once per sample)."""
    B, n, dim = xb.shape
    inner = heads * dim_head
    assert w_qkv.shape == (dim, 3 * inner)
    assert w_out.shape == (inner, dim)

    # Fold the attention scale into the Q columns of the QKV weight (one-time,
    # outside the kernel):  (x @ (Wq*scale)) @ k^T == scale * (q @ k^T).
    scale = dim_head ** (-0.5)
    w_qkv_scaled = jnp.concatenate(
        [w_qkv[:, :inner] * scale, w_qkv[:, inner:]], axis=-1)

    if block_b is None:
        block_b = _pick_block_b(B, n)
    assert B % block_b == 0, "batch must be divisible by block_b"
    grid_b = B // block_b

    kernel = functools.partial(_attention_kernel, heads=heads, dim_head=dim_head)

    out = pl.pallas_call(
        kernel,
        out_shape=jax.ShapeDtypeStruct((B, n, dim), xb.dtype),
        grid=(grid_b,),
        in_specs=[
            pl.BlockSpec((block_b, n, dim), lambda i: (i, 0, 0)),
            pl.BlockSpec((dim, 3 * inner), lambda i: (0, 0)),
            pl.BlockSpec((inner, dim), lambda i: (0, 0)),
        ],
        out_specs=pl.BlockSpec((block_b, n, dim), lambda i: (i, 0, 0)),
        compiler_params=pltpu.CompilerParams(
            dimension_semantics=("parallel",)),      # shards across TCs on v7x
    )(xb, w_qkv_scaled, w_out)
    return out


def attention_forward(x, w_qkv, w_out, *, heads, dim_head):
    """x: [n, dim] -> [1, n, dim]  (matches the PyTorch module's forward)."""
    return attention_forward_batched(
        x[None], w_qkv, w_out, heads=heads, dim_head=dim_head)


def attention_reference(x, w_qkv, w_out, *, heads, dim_head):
    """Pure-JAX reference for one sample, x: [n, dim] -> [n, dim]."""
    n, dim = x.shape
    inner = heads * dim_head
    scale = dim_head ** (-0.5)
    qkv = x @ w_qkv                               # [n, 3*inner]
    q, k, v = jnp.split(qkv, 3, axis=-1)          # each [n, inner]
    def to_heads(t):                              # 'b n (h d) -> b h n d' with b=1
        return t.reshape(n, heads, dim_head).transpose(1, 0, 2)  # [h, n, d]
    q, k, v = map(to_heads, (q, k, v))
    dots = jnp.einsum("hnd,hmd->hnm", q, k) * scale
    attn = jax.nn.softmax(dots, axis=-1)
    out = jnp.einsum("hnm,hmd->hnd", attn, v)     # [h, n, d]
    out = out.transpose(1, 0, 2).reshape(n, inner)  # 'b h n d -> b n (h d)'
    return out @ w_out
    # TODO(synk): nn.Dropout(p=0.0) is an identity at inference and is omitted.


if __name__ == "__main__":
    # Module hyperparameters (consistent with forward(): dim = 2*feature_dim):
    #   dim = 32, heads = 4, dim_head = 16 -> inner_dim = 64, project_out = True
    dim, heads, dim_head = 32, 4, 16
    inner = heads * dim_head
    n = 8       # t - 1 (sequence length)
    B = 32      # number of samples batched into one pallas_call

    key = jax.random.PRNGKey(0)
    kx, kxb, kqkv, kout = jax.random.split(key, 4)

    x = jax.random.normal(kx, (n, dim), dtype=jnp.float32)
    xb = jax.random.normal(kxb, (B, n, dim), dtype=jnp.float32)
    # Weights stored as [in, out] (i.e. torch Linear weight.T), no biases.
    w_qkv = jax.random.normal(kqkv, (dim, 3 * inner), dtype=jnp.float32) * 0.05
    w_out = jax.random.normal(kout, (inner, dim), dtype=jnp.float32) * 0.05

    # Single-sample path (exactly the module's forward signature).
    y = attention_forward(x, w_qkv, w_out, heads=heads, dim_head=dim_head)
    y = jax.block_until_ready(y)
    y_ref = attention_reference(x, w_qkv, w_out, heads=heads, dim_head=dim_head)[None]
    assert y.shape == (1, n, dim), y.shape
    # Tolerance relaxed vs. exact divide because of approx-reciprocal softmax norm.
    assert jnp.allclose(y, y_ref, atol=1e-2, rtol=1e-2), "single-sample mismatch"

    # Batched path: block_b=16 -> 128 rows per grid step, grid=(2,) "parallel".
    yb = attention_forward_batched(
        xb, w_qkv, w_out, heads=heads, dim_head=dim_head, block_b=16)
    yb = jax.block_until_ready(yb)
    yb_ref = jax.vmap(
        lambda s: attention_reference(s, w_qkv, w_out, heads=heads, dim_head=dim_head)
    )(xb)
    assert yb.shape == (B, n, dim), yb.shape
    assert jnp.allclose(yb, yb_ref, atol=1e-2, rtol=1e-2), "batched mismatch"

    print("KERNEL_OK")
</pallas_src>

<mosaic_0001>
module attributes {stable_mosaic.version = 11 : i64} {
  func.func @_attention_kernel(%arg0: i32, %arg1: memref<1x8x32xf32, #tpu.memory_space<vmem>>, %arg2: memref<32x192xf32, #tpu.memory_space<vmem>>, %arg3: memref<64x32xf32, #tpu.memory_space<vmem>>, %arg4: memref<1x8x32xf32, #tpu.memory_space<vmem>>) attributes {dimension_semantics = [#tpu.dimension_semantics<parallel>], iteration_bounds = array<i64: 1>, scalar_prefetch = 0 : i64, scratch_operands = 0 : i64, tpu.core_type = #tpu.core_type<tc>, window_params = [{transform_indices = @transform_0, window_bounds = array<i64: 1, 8, 32>}, {pipeline_mode = #tpu.pipeline_mode<synchronous>, transform_indices = @transform_1, window_bounds = array<i64: 32, 192>}, {pipeline_mode = #tpu.pipeline_mode<synchronous>, transform_indices = @transform_2, window_bounds = array<i64: 64, 32>}, {transform_indices = @transform_3, window_bounds = array<i64: 1, 8, 32>}]} {
    %c0 = arith.constant 0 : index
    %c0_0 = arith.constant 0 : index
    %c0_1 = arith.constant 0 : index
    %0 = vector.load %arg1[%c0, %c0_0, %c0_1] : memref<1x8x32xf32, #tpu.memory_space<vmem>>, vector<1x8x32xf32>
    %c0_2 = arith.constant 0 : index
    %c0_3 = arith.constant 0 : index
    %1 = vector.load %arg2[%c0_2, %c0_3] : memref<32x192xf32, #tpu.memory_space<vmem>>, vector<32x192xf32>
    %cst = arith.constant dense<0.000000e+00> : vector<1x8x192xf32>
    %2 = tpu.matmul %0, %1, %cst {dimension_numbers = #tpu.dot_dimension_numbers<[2], [0], [0, 1], [1], [0, 0, 0, 1, 1, 1], [], []>} : vector<1x8x32xf32>, vector<32x192xf32>, vector<1x8x192xf32> -> vector<1x8x192xf32>
    %cst_4 = arith.constant 0.000000e+00 : f32
    %3 = vector.broadcast %cst_4 : f32 to vector<1x8x32xf32>
    %4 = vector.extract_strided_slice %2 {offsets = [0, 0, 0], sizes = [1, 8, 16], strides = [1, 1, 1]} : vector<1x8x192xf32> to vector<1x8x16xf32>
    %5 = vector.extract_strided_slice %2 {offsets = [0, 0, 64], sizes = [1, 8, 16], strides = [1, 1, 1]} : vector<1x8x192xf32> to vector<1x8x16xf32>
    %6 = vector.extract_strided_slice %2 {offsets = [0, 0, 128], sizes = [1, 8, 16], strides = [1, 1, 1]} : vector<1x8x192xf32> to vector<1x8x16xf32>
    %cst_5 = arith.constant dense<0.000000e+00> : vector<1x8x8xf32>
    %7 = tpu.matmul %4, %5, %cst_5 {dimension_numbers = #tpu.dot_dimension_numbers<[2], [2], [1], [1], [0, 0, 0, 1, 1, 1], [0], [0]>} : vector<1x8x16xf32>, vector<1x8x16xf32>, vector<1x8x8xf32> -> vector<1x8x8xf32>
    %cst_6 = arith.constant dense<0xFF800000> : vector<1x8xf32>
    %8 = vector.multi_reduction <maximumf>, %7, %cst_6 [2] : vector<1x8x8xf32> to vector<1x8xf32>
    %9 = vector.shape_cast %8 : vector<1x8xf32> to vector<1x8x1xf32>
    %10 = vector.broadcast %9 : vector<1x8x1xf32> to vector<1x8x8xf32>
    %11 = arith.subf %7, %10 : vector<1x8x8xf32>
    %12 = math.exp %11 : vector<1x8x8xf32>
    %cst_7 = arith.constant dense<0.000000e+00> : vector<1x8xf32>
    %13 = vector.multi_reduction <add>, %12, %cst_7 [2] : vector<1x8x8xf32> to vector<1x8xf32>
    %14 = vector.shape_cast %13 : vector<1x8xf32> to vector<1x8x1xf32>
    %15 = tpu.reciprocal %14 {approx = true} : vector<1x8x1xf32> -> vector<1x8x1xf32>
    %16 = vector.broadcast %15 : vector<1x8x1xf32> to vector<1x8x8xf32>
    %17 = arith.mulf %12, %16 : vector<1x8x8xf32>
    %cst_8 = arith.constant dense<0.000000e+00> : vector<1x8x16xf32>
    %18 = tpu.matmul %17, %6, %cst_8 {dimension_numbers = #tpu.dot_dimension_numbers<[2], [1], [1], [2], [0, 0, 0, 1, 1, 2], [0], [0]>} : vector<1x8x8xf32>, vector<1x8x16xf32>, vector<1x8x16xf32> -> vector<1x8x16xf32>
    %c0_9 = arith.constant 0 : index
    %c0_10 = arith.constant 0 : index
    %19 = vector.load %arg3[%c0_9, %c0_10] : memref<64x32xf32, #tpu.memory_space<vmem>>, vector<16x32xf32>
    %cst_11 = arith.constant dense<0.000000e+00> : vector<1x8x32xf32>
    %20 = tpu.matmul %18, %19, %cst_11 {dimension_numbers = #tpu.dot_dimension_numbers<[2], [0], [0, 1], [1], [0, 0, 0, 1, 1, 1], [], []>} : vector<1x8x16xf32>, vector<16x32xf32>, vector<1x8x32xf32> -> vector<1x8x32xf32>
    %21 = arith.addf %3, %20 : vector<1x8x32xf32>
    %22 = vector.extract_strided_slice %2 {offsets = [0, 0, 16], sizes = [1, 8, 16], strides = [1, 1, 1]} : vector<1x8x192xf32> to vector<1x8x16xf32>
    %23 = vector.extract_strided_slice %2 {offsets = [0, 0, 80], sizes = [1, 8, 16], strides = [1, 1, 1]} : vector<1x8x192xf32> to vector<1x8x16xf32>
    %24 = vector.extract_strided_slice %2 {offsets = [0, 0, 144], sizes = [1, 8, 16], strides = [1, 1, 1]} : vector<1x8x192xf32> to vector<1x8x16xf32>
    %cst_12 = arith.constant dense<0.000000e+00> : vector<1x8x8xf32>
    %25 = tpu.matmul %22, %23, %cst_12 {dimension_numbers = #tpu.dot_dimension_numbers<[2], [2], [1], [1], [0, 0, 0, 1, 1, 1], [0], [0]>} : vector<1x8x16xf32>, vector<1x8x16xf32>, vector<1x8x8xf32> -> vector<1x8x8xf32>
    %cst_13 = arith.constant dense<0xFF800000> : vector<1x8xf32>
    %26 = vector.multi_reduction <maximumf>, %25, %cst_13 [2] : vector<1x8x8xf32> to vector<1x8xf32>
    %27 = vector.shape_cast %26 : vector<1x8xf32> to vector<1x8x1xf32>
    %28 = vector.broadcast %27 : vector<1x8x1xf32> to vector<1x8x8xf32>
    %29 = arith.subf %25, %28 : vector<1x8x8xf32>
    %30 = math.exp %29 : vector<1x8x8xf32>
    %cst_14 = arith.constant dense<0.000000e+00> : vector<1x8xf32>
    %31 = vector.multi_reduction <add>, %30, %cst_14 [2] : vector<1x8x8xf32> to vector<1x8xf32>
    %32 = vector.shape_cast %31 : vector<1x8xf32> to vector<1x8x1xf32>
    %33 = tpu.reciprocal %32 {approx = true} : vector<1x8x1xf32> -> vector<1x8x1xf32>
    %34 = vector.broadcast %33 : vector<1x8x1xf32> to vector<1x8x8xf32>
    %35 = arith.mulf %30, %34 : vector<1x8x8xf32>
    %cst_15 = arith.constant dense<0.000000e+00> : vector<1x8x16xf32>
    %36 = tpu.matmul %35, %24, %cst_15 {dimension_numbers = #tpu.dot_dimension_numbers<[2], [1], [1], [2], [0, 0, 0, 1, 1, 2], [0], [0]>} : vector<1x8x8xf32>, vector<1x8x16xf32>, vector<1x8x16xf32> -> vector<1x8x16xf32>
    %c16 = arith.constant 16 : index
    %c0_16 = arith.constant 0 : index
    %37 = vector.load %arg3[%c16, %c0_16] : memref<64x32xf32, #tpu.memory_space<vmem>>, vector<16x32xf32>
    %cst_17 = arith.constant dense<0.000000e+00> : vector<1x8x32xf32>
    %38 = tpu.matmul %36, %37, %cst_17 {dimension_numbers = #tpu.dot_dimension_numbers<[2], [0], [0, 1], [1], [0, 0, 0, 1, 1, 1], [], []>} : vector<1x8x16xf32>, vector<16x32xf32>, vector<1x8x32xf32> -> vector<1x8x32xf32>
    %39 = arith.addf %21, %38 : vector<1x8x32xf32>
    %40 = vector.extract_strided_slice %2 {offsets = [0, 0, 32], sizes = [1, 8, 16], strides = [1, 1, 1]} : vector<1x8x192xf32> to vector<1x8x16xf32>
    %41 = vector.extract_strided_slice %2 {offsets = [0, 0, 96], sizes = [1, 8, 16], strides = [1, 1, 1]} : vector<1x8x192xf32> to vector<1x8x16xf32>
    %42 = vector.extract_strided_slice %2 {offsets = [0, 0, 160], sizes = [1, 8, 16], strides = [1, 1, 1]} : vector<1x8x192xf32> to vector<1x8x16xf32>
    %cst_18 = arith.constant dense<0.000000e+00> : vector<1x8x8xf32>
    %43 = tpu.matmul %40, %41, %cst_18 {dimension_numbers = #tpu.dot_dimension_numbers<[2], [2], [1], [1], [0, 0, 0, 1, 1, 1], [0], [0]>} : vector<1x8x16xf32>, vector<1x8x16xf32>, vector<1x8x8xf32> -> vector<1x8x8xf32>
    %cst_19 = arith.constant dense<0xFF800000> : vector<1x8xf32>
    %44 = vector.multi_reduction <maximumf>, %43, %cst_19 [2] : vector<1x8x8xf32> to vector<1x8xf32>
    %45 = vector.shape_cast %44 : vector<1x8xf32> to vector<1x8x1xf32>
    %46 = vector.broadcast %45 : vector<1x8x1xf32> to vector<1x8x8xf32>
    %47 = arith.subf %43, %46 : vector<1x8x8xf32>
    %48 = math.exp %47 : vector<1x8x8xf32>
    %cst_20 = arith.constant dense<0.000000e+00> : vector<1x8xf32>
    %49 = vector.multi_reduction <add>, %48, %cst_20 [2] : vector<1x8x8xf32> to vector<1x8xf32>
    %50 = vector.shape_cast %49 : vector<1x8xf32> to vector<1x8x1xf32>
    %51 = tpu.reciprocal %50 {approx = true} : vector<1x8x1xf32> -> vector<1x8x1xf32>
    %52 = vector.broadcast %51 : vector<1x8x1xf32> to vector<1x8x8xf32>
    %53 = arith.mulf %48, %52 : vector<1x8x8xf32>
    %cst_21 = arith.constant dense<0.000000e+00> : vector<1x8x16xf32>
    %54 = tpu.matmul %53, %42, %cst_21 {dimension_numbers = #tpu.dot_dimension_numbers<[2], [1], [1], [2], [0, 0, 0, 1, 1, 2], [0], [0]>} : vector<1x8x8xf32>, vector<1x8x16xf32>, vector<1x8x16xf32> -> vector<1x8x16xf32>
    %c32 = arith.constant 32 : index
    %c0_22 = arith.constant 0 : index
    %55 = vector.load %arg3[%c32, %c0_22] : memref<64x32xf32, #tpu.memory_space<vmem>>, vector<16x32xf32>
    %cst_23 = arith.constant dense<0.000000e+00> : vector<1x8x32xf32>
    %56 = tpu.matmul %54, %55, %cst_23 {dimension_numbers = #tpu.dot_dimension_numbers<[2], [0], [0, 1], [1], [0, 0, 0, 1, 1, 1], [], []>} : vector<1x8x16xf32>, vector<16x32xf32>, vector<1x8x32xf32> -> vector<1x8x32xf32>
    %57 = arith.addf %39, %56 : vector<1x8x32xf32>
    %58 = vector.extract_strided_slice %2 {offsets = [0, 0, 48], sizes = [1, 8, 16], strides = [1, 1, 1]} : vector<1x8x192xf32> to vector<1x8x16xf32>
    %59 = vector.extract_strided_slice %2 {offsets = [0, 0, 112], sizes = [1, 8, 16], strides = [1, 1, 1]} : vector<1x8x192xf32> to vector<1x8x16xf32>
    %60 = vector.extract_strided_slice %2 {offsets = [0, 0, 176], sizes = [1, 8, 16], strides = [1, 1, 1]} : vector<1x8x192xf32> to vector<1x8x16xf32>
    %cst_24 = arith.constant dense<0.000000e+00> : vector<1x8x8xf32>
    %61 = tpu.matmul %58, %59, %cst_24 {dimension_numbers = #tpu.dot_dimension_numbers<[2], [2], [1], [1], [0, 0, 0, 1, 1, 1], [0], [0]>} : vector<1x8x16xf32>, vector<1x8x16xf32>, vector<1x8x8xf32> -> vector<1x8x8xf32>
    %cst_25 = arith.constant dense<0xFF800000> : vector<1x8xf32>
    %62 = vector.multi_reduction <maximumf>, %61, %cst_25 [2] : vector<1x8x8xf32> to vector<1x8xf32>
    %63 = vector.shape_cast %62 : vector<1x8xf32> to vector<1x8x1xf32>
    %64 = vector.broadcast %63 : vector<1x8x1xf32> to vector<1x8x8xf32>
    %65 = arith.subf %61, %64 : vector<1x8x8xf32>
    %66 = math.exp %65 : vector<1x8x8xf32>
    %cst_26 = arith.constant dense<0.000000e+00> : vector<1x8xf32>
    %67 = vector.multi_reduction <add>, %66, %cst_26 [2] : vector<1x8x8xf32> to vector<1x8xf32>
    %68 = vector.shape_cast %67 : vector<1x8xf32> to vector<1x8x1xf32>
    %69 = tpu.reciprocal %68 {approx = true} : vector<1x8x1xf32> -> vector<1x8x1xf32>
    %70 = vector.broadcast %69 : vector<1x8x1xf32> to vector<1x8x8xf32>
    %71 = arith.mulf %66, %70 : vector<1x8x8xf32>
    %cst_27 = arith.constant dense<0.000000e+00> : vector<1x8x16xf32>
    %72 = tpu.matmul %71, %60, %cst_27 {dimension_numbers = #tpu.dot_dimension_numbers<[2], [1], [1], [2], [0, 0, 0, 1, 1, 2], [0], [0]>} : vector<1x8x8xf32>, vector<1x8x16xf32>, vector<1x8x16xf32> -> vector<1x8x16xf32>
    %c48 = arith.constant 48 : index
    %c0_28 = arith.constant 0 : index
    %73 = vector.load %arg3[%c48, %c0_28] : memref<64x32xf32, #tpu.memory_space<vmem>>, vector<16x32xf32>
    %cst_29 = arith.constant dense<0.000000e+00> : vector<1x8x32xf32>
    %74 = tpu.matmul %72, %73, %cst_29 {dimension_numbers = #tpu.dot_dimension_numbers<[2], [0], [0, 1], [1], [0, 0, 0, 1, 1, 1], [], []>} : vector<1x8x16xf32>, vector<16x32xf32>, vector<1x8x32xf32> -> vector<1x8x32xf32>
    %75 = arith.addf %57, %74 : vector<1x8x32xf32>
    %c0_30 = arith.constant 0 : index
    %c0_31 = arith.constant 0 : index
    %c0_32 = arith.constant 0 : index
    %76 = vector.load %arg4[%c0_30, %c0_31, %c0_32] : memref<1x8x32xf32, #tpu.memory_space<vmem>>, vector<1x8x32xf32>
    tpu.vector_store %arg4[%c0_30, %c0_31, %c0_32], %75 {strides = array<i32>} : memref<1x8x32xf32, #tpu.memory_space<vmem>>, vector<1x8x32xf32>,
    return
  }
  func.func @transform_0(%arg0: i32) -> (i32, i32, i32) {
    %c0_i32 = arith.constant 0 : i32
    %c0_i32_0 = arith.constant 0 : i32
    %c0_i32_1 = arith.constant 0 : i32
    return %arg0, %c0_i32, %c0_i32_0 : i32, i32, i32
  }
  func.func @transform_1(%arg0: i32) -> (i32, i32) {
    %c0_i32 = arith.constant 0 : i32
    %c0_i32_0 = arith.constant 0 : i32
    %c0_i32_1 = arith.constant 0 : i32
    return %c0_i32, %c0_i32_0 : i32, i32
  }
  func.func @transform_2(%arg0: i32) -> (i32, i32) {
    %c0_i32 = arith.constant 0 : i32
    %c0_i32_0 = arith.constant 0 : i32
    %c0_i32_1 = arith.constant 0 : i32
    return %c0_i32, %c0_i32_0 : i32, i32
  }
  func.func @transform_3(%arg0: i32) -> (i32, i32, i32) {
    %c0_i32 = arith.constant 0 : i32
    %c0_i32_0 = arith.constant 0 : i32
    %c0_i32_1 = arith.constant 0 : i32
    return %arg0, %c0_i32, %c0_i32_0 : i32, i32, i32
  }
}

</mosaic_0001>

<llo_original>
// kernel: tpu_custom_call.1
$region0: #{tpu_custom_call.1}
  #allocation0 [shape = 'u32[]', space=smem, size = 0x4, offset = 0x4, fixed_abs, tag = 'smem constant byte address 0x4 - core index']
  #allocation1 [shape = 'u32[144,128]{1,0:T(1,128)}', space=vmem, size = 0x12000, scoped, tag = 'internal scratch']
  %s0 = inlined_call_operand.vmem [shape: f32[1,8,32], index: 0, kind: input, shape index: {}]
  %s1 = inlined_call_operand.vmem [shape: f32[32,192], index: 1, kind: input, shape index: {}]
  %s2 = inlined_call_operand.vmem [shape: f32[64,32], index: 2, kind: input, shape index: {}]
  %s3 = inlined_call_operand.hbm [shape: f32[1,8,32], index: 3, kind: output, shape index: {}]
  %s4 = sld [smem:[#allocation0]]
  $region22: #{tpu_custom_call.1} parent=0
    _
  %s6 = ssub.s32 1, %s4
  %s7 = scalar_select 0, %s6, %s4
  $region1: #{tpu_custom_call.1} parent=0
    #allocation2 [shape = 'u8[4096]{0}', space=vmem, size = 0x1000, scoped, tag = 'output window, operand 0, single buffered']
    #allocation3 [shape = 's32[1]{0}', space=sflag, size = 0x4, scoped, tag = 'scoped memory for tpu_custom_call.1']
    %8 = vsyncpa [#allocation3], 0
    // Predicated region
    $region2: #{tpu_custom_call.1} parent=1 // pred_check
      _
    $region3: #{tpu_custom_call.1} parent=1 // pred_check_branch
      %10 = sbr.rel (0) target = $region5
    $region4: #{tpu_custom_call.1} parent=1 // pred_region
      _
    $region5: #{tpu_custom_call.1} parent=1 // pred_fallthru
      _
    // Predicated region
    $region6: #{tpu_custom_call.1} parent=1 // pred_check
      _
    $region7: #{tpu_custom_call.1} parent=1 // pred_check_branch
      %12 = sbr.rel (0) target = $region9
    $region8: #{tpu_custom_call.1} parent=1 // pred_region
      _
    $region9: #{tpu_custom_call.1} parent=1 // pred_fallthru
      _
    // Predicated region
    $region10: #{tpu_custom_call.1} parent=1 // pred_check
      _
    $region11: #{tpu_custom_call.1} parent=1 // pred_check_branch
      %14 = sbr.rel (0) target = $region13
    $region12: #{tpu_custom_call.1} parent=1 // pred_region
      _
    $region13: #{tpu_custom_call.1} parent=1 // pred_fallthru
      _
    %v15 = vld [vmem:[%s0] sm:$0xff]
    %v16 = vld [vmem:[%s1] sm:$0xff]
    %v17 = vld [vmem:[%s1 + $0x8] sm:$0xff]
    %v18 = vld [vmem:[%s1 + $0x10] sm:$0xff]
    %v19 = vld [vmem:[%s1 + $0x18] sm:$0xff]
    %v20 = vld [vmem:[%s1 + $0x20] sm:$0xff]
    %v21 = vld [vmem:[%s1 + $0x28] sm:$0xff]
    %v22 = vld [vmem:[%s1 + $0x30] sm:$0xff]
    %v23 = vld [vmem:[%s1 + $0x38] sm:$0xff]
    %vm24 = vcmask 261120
    %v26 = vsel %vm24, %v15, 0
    %28 = vmatprep.subr.mxu0 %v17
    %29 = vmatpush1.msra.mxu0 %v16
    %30 = vmatprep.subr.mxu0 %v19
    %31 = vmatpush1.msra.mxu0 %v18
    %32 = vmatprep.subr.mxu0 %v21
    %33 = vmatpush1.msra.mxu0 %v20
    %34 = vmatprep.subr.mxu0 %v23
    %35 = vmatpush1.msra.mxu0 %v22
    %36 = vmatprep.subr.mxu0 0.0
    %37 = vmatpush1.msra.mxu0 0.0
    %38 = vmatprep.subr.mxu0 0.0
    %39 = vmatpush1.msra.mxu0 0.0
    %40 = vmatprep.subr.mxu0 0.0
    %41 = vmatpush1.msra.mxu0 0.0
    %42 = vmatprep.subr.mxu0 0.0
    %43 = vmatpush1.msra.mxu0 0.0
    %44 = vmatprep.subr.mxu0 0.0
    %45 = vmatpush1.msra.mxu0 0.0
    %46 = vmatprep.subr.mxu0 0.0
    %47 = vmatpush1.msra.mxu0 0.0
    %48 = vmatprep.subr.mxu0 0.0
    %49 = vmatpush1.msra.mxu0 0.0
    %50 = vmatprep.subr.mxu0 0.0
    %51 = vmatpush1.msra.mxu0 0.0
    %52 = vmatprep.subr.mxu0 0.0
    %53 = vmatpush1.msra.mxu0 0.0
    %54 = vmatprep.subr.mxu0 0.0
    %55 = vmatpush1.msra.mxu0 0.0
    %56 = vmatprep.subr.mxu0 0.0
    %57 = vmatpush1.msra.mxu0 0.0
    %58 = vmatprep.subr.mxu0 0.0
    %59 = vmatpush1.msra.mxu0 0.0
    %60 = vmatprep.subr.mxu0 0.0
    %61 = vmatpush1.msra.mxu0 0.0
    %62 = vmatprep.subr.mxu0 0.0
    %63 = vmatpush1.msra.mxu0 0.0
    %64 = vmatprep.subr.mxu0 0.0
    %65 = vmatpush1.msra.mxu0 0.0
    %66 = vmatprep.subr.mxu0 0.0
    %67 = vmatpush1.msra.mxu0 0.0
    %68 = vmatprep.subr.mxu0 0.0
    %69 = vmatpush1.msra.mxu0 0.0
    %70 = vmatprep.subr.mxu0 0.0
    %71 = vmatpush1.msra.mxu0 0.0
    %72 = vmatprep.subr.mxu0 0.0
    %73 = vmatpush1.msra.mxu0 0.0
    %74 = vmatprep.subr.mxu0 0.0
    %75 = vmatpush1.msra.mxu0 0.0
    %76 = vmatprep.subr.mxu0 0.0
    %77 = vmatpush1.msra.mxu0 0.0
    %78 = vmatprep.subr.mxu0 0.0
    %79 = vmatpush1.msra.mxu0 0.0
    %80 = vmatprep.subr.mxu0 0.0
    %81 = vmatpush1.msra.mxu0 0.0
    %82 = vmatprep.subr.mxu0 0.0
    %83 = vmatpush1.msra.mxu0 0.0
    %84 = vmatprep.subr.mxu0 0.0
    %85 = vmatpush1.msra.mxu0 0.0
    %86 = vmatprep.subr.mxu0 0.0
    %87 = vmatpush1.msra.mxu0 0.0
    %88 = vmatprep.subr.mxu0 0.0
    %89 = vmatpush1.msra.mxu0 0.0
    %90 = vmatprep.subr.mxu0 0.0
    %91 = vmatpush1.msra.mxu0 0.0
    %92 = vmatprep.mubr.f32.mxu0 0.0
    %93 = vmatmul.mubr.f32.gmra.mrb[0].mxu0 %v26
    %v94 = vpop.f32.mrb[0].mxu0
    %v95 = vadd.f32 0.0, %v94
    %v96 = vpop.f32.mrb[0].mxu0
    %v97 = vadd.f32 0.0, %v96
    %98 = vdwg.mxu0
    %100 = vrot.lane.b32.xlu0 %v95, 64
    %v101 = vpop.permute.xlu0 %100
    %vm102 = vcmask 130048
    %v103 = vsel %vm102, %v95, 0
    %v105 = vsel %vm102, %v101, 0
    %107 = vmatprep.subr.mxu0 0.0
    %108 = vmatpush1.xpose.msra.mxu0 %v105
    %109 = vmatprep.subr.mxu0 0.0
    %110 = vmatpush1.xpose.msra.mxu0 0.0
    %111 = vmatprep.subr.mxu0 0.0
    %112 = vmatpush1.xpose.msra.mxu0 0.0
    %113 = vmatprep.subr.mxu0 0.0
    %114 = vmatpush1.xpose.msra.mxu0 0.0
    %115 = vmatprep.subr.mxu0 0.0
    %116 = vmatpush1.xpose.msra.mxu0 0.0
    %117 = vmatprep.subr.mxu0 0.0
    %118 = vmatpush1.xpose.msra.mxu0 0.0
    %119 = vmatprep.subr.mxu0 0.0
    %120 = vmatpush1.xpose.msra.mxu0 0.0
    %121 = vmatprep.subr.mxu0 0.0
    %122 = vmatpush1.xpose.msra.mxu0 0.0
    %123 = vmatprep.subr.mxu0 0.0
    %124 = vmatpush1.xpose.msra.mxu0 0.0
    %125 = vmatprep.subr.mxu0 0.0
    %126 = vmatpush1.xpose.msra.mxu0 0.0
    %127 = vmatprep.subr.mxu0 0.0
    %128 = vmatpush1.xpose.msra.mxu0 0.0
    %129 = vmatprep.subr.mxu0 0.0
    %130 = vmatpush1.xpose.msra.mxu0 0.0
    %131 = vmatprep.subr.mxu0 0.0
    %132 = vmatpush1.xpose.msra.mxu0 0.0
    %133 = vmatprep.subr.mxu0 0.0
    %134 = vmatpush1.xpose.msra.mxu0 0.0
    %135 = vmatprep.subr.mxu0 0.0
    %136 = vmatpush1.xpose.msra.mxu0 0.0
    %137 = vmatprep.subr.mxu0 0.0
    %138 = vmatpush1.xpose.msra.mxu0 0.0
    %139 = vmatprep.subr.mxu0 0.0
    %140 = vmatpush1.xpose.msra.mxu0 0.0
    %141 = vmatprep.subr.mxu0 0.0
    %142 = vmatpush1.xpose.msra.mxu0 0.0
    %143 = vmatprep.subr.mxu0 0.0
    %144 = vmatpush1.xpose.msra.mxu0 0.0
    %145 = vmatprep.subr.mxu0 0.0
    %146 = vmatpush1.xpose.msra.mxu0 0.0
    %147 = vmatprep.subr.mxu0 0.0
    %148 = vmatpush1.xpose.msra.mxu0 0.0
    %149 = vmatprep.subr.mxu0 0.0
    %150 = vmatpush1.xpose.msra.mxu0 0.0
    %151 = vmatprep.subr.mxu0 0.0
    %152 = vmatpush1.xpose.msra.mxu0 0.0
    %153 = vmatprep.subr.mxu0 0.0
    %154 = vmatpush1.xpose.msra.mxu0 0.0
    %155 = vmatprep.subr.mxu0 0.0
    %156 = vmatpush1.xpose.msra.mxu0 0.0
    %157 = vmatprep.subr.mxu0 0.0
    %158 = vmatpush1.xpose.msra.mxu0 0.0
    %159 = vmatprep.subr.mxu0 0.0
    %160 = vmatpush1.xpose.msra.mxu0 0.0
    %161 = vmatprep.subr.mxu0 0.0
    %162 = vmatpush1.xpose.msra.mxu0 0.0
    %163 = vmatprep.subr.mxu0 0.0
    %164 = vmatpush1.xpose.msra.mxu0 0.0
    %165 = vmatprep.subr.mxu0 0.0
    %166 = vmatpush1.xpose.msra.mxu0 0.0
    %167 = vmatprep.subr.mxu0 0.0
    %168 = vmatpush1.xpose.msra.mxu0 0.0
    %169 = vmatprep.subr.mxu0 0.0
    %170 = vmatpush1.xpose.msra.mxu0 0.0
    %171 = vmatprep.mubr.f32.mxu0 0.0
    %172 = vmatmul.mubr.f32.gmra.mrb[0].mxu0 %v103
    %v173 = vpop.f32.mrb[0].mxu0
    %v174 = vadd.f32 0.0, %v173
    %v175 = vpop.f32.mrb[0].mxu0
    %176 = vdwg.mxu0
    %vm177 = vcmask 64512
    %v178 = vsel %vm177, %v174, -inf
    %179 = vmax.xlane.f32.xlu0 %v178
    %v180 = vpop.xlane.xlu0 %179
    %v181 = vsub.f32 %v174, %v180
    %v182 = vmul.f32 %v181, 1.442695
    %v183 = vpow.pop %v182
    %v184 = vsel %vm177, %v183, 0.0
    %185 = vadd.xlane.f32.xlu0 %v184
    %v186 = vpop.xlane.xlu0 %185
    %v187 = vrcp.pop %v186
    %v188 = vmul.f32 %v183, %v187
    %v190 = vsel %vm177, %v188, 0
    %192 = vmatprep.subr.mxu0 0.0
    %193 = vmatpush1.msra.mxu0 %v97
    %194 = vmatprep.subr.mxu0 0.0
    %195 = vmatpush1.msra.mxu0 0.0
    %196 = vmatprep.subr.mxu0 0.0
    %197 = vmatpush1.msra.mxu0 0.0
    %198 = vmatprep.subr.mxu0 0.0
    %199 = vmatpush1.msra.mxu0 0.0
    %200 = vmatprep.subr.mxu0 0.0
    %201 = vmatpush1.msra.mxu0 0.0
    %202 = vmatprep.subr.mxu0 0.0
    %203 = vmatpush1.msra.mxu0 0.0
    %204 = vmatprep.subr.mxu0 0.0
    %205 = vmatpush1.msra.mxu0 0.0
    %206 = vmatprep.subr.mxu0 0.0
    %207 = vmatpush1.msra.mxu0 0.0
    %208 = vmatprep.subr.mxu0 0.0
    %209 = vmatpush1.msra.mxu0 0.0
    %210 = vmatprep.subr.mxu0 0.0
    %211 = vmatpush1.msra.mxu0 0.0
    %212 = vmatprep.subr.mxu0 0.0
    %213 = vmatpush1.msra.mxu0 0.0
    %214 = vmatprep.subr.mxu0 0.0
    %215 = vmatpush1.msra.mxu0 0.0
    %216 = vmatprep.subr.mxu0 0.0
    %217 = vmatpush1.msra.mxu0 0.0
    %218 = vmatprep.subr.mxu0 0.0
    %219 = vmatpush1.msra.mxu0 0.0
    %220 = vmatprep.subr.mxu0 0.0
    %221 = vmatpush1.msra.mxu0 0.0
    %222 = vmatprep.subr.mxu0 0.0
    %223 = vmatpush1.msra.mxu0 0.0
    %224 = vmatprep.subr.mxu0 0.0
    %225 = vmatpush1.msra.mxu0 0.0
    %226 = vmatprep.subr.mxu0 0.0
    %227 = vmatpush1.msra.mxu0 0.0
    %228 = vmatprep.subr.mxu0 0.0
    %229 = vmatpush1.msra.mxu0 0.0
    %230 = vmatprep.subr.mxu0 0.0
    %231 = vmatpush1.msra.mxu0 0.0
    %232 = vmatprep.subr.mxu0 0.0
    %233 = vmatpush1.msra.mxu0 0.0
    %234 = vmatprep.subr.mxu0 0.0
    %235 = vmatpush1.msra.mxu0 0.0
    %236 = vmatprep.subr.mxu0 0.0
    %237 = vmatpush1.msra.mxu0 0.0
    %238 = vmatprep.subr.mxu0 0.0
    %239 = vmatpush1.msra.mxu0 0.0
    %240 = vmatprep.subr.mxu0 0.0
    %241 = vmatpush1.msra.mxu0 0.0
    %242 = vmatprep.subr.mxu0 0.0
    %243 = vmatpush1.msra.mxu0 0.0
    %244 = vmatprep.subr.mxu0 0.0
    %245 = vmatpush1.msra.mxu0 0.0
    %246 = vmatprep.subr.mxu0 0.0
    %247 = vmatpush1.msra.mxu0 0.0
    %248 = vmatprep.subr.mxu0 0.0
    %249 = vmatpush1.msra.mxu0 0.0
    %250 = vmatprep.subr.mxu0 0.0
    %251 = vmatpush1.msra.mxu0 0.0
    %252 = vmatprep.subr.mxu0 0.0
    %253 = vmatpush1.msra.mxu0 0.0
    %254 = vmatprep.subr.mxu0 0.0
    %255 = vmatpush1.msra.mxu0 0.0
    %256 = vmatprep.mubr.f32.mxu0 0.0
    %257 = vmatmul.mubr.f32.gmra.mrb[0].mxu0 %v190
    %v258 = vpop.f32.mrb[0].mxu0
    %v259 = vadd.f32 0.0, %v258
    %v260 = vpop.f32.mrb[0].mxu0
    %261 = vdwg.mxu0
    %v262 = vld [vmem:[%s2] sm:$0xff]
    %v263 = vld [vmem:[%s2 + $0x8] sm:$0xff]
    %264 = vrot.lane.b32.xlu0 %v95, 112
    %v265 = vpop.permute.xlu0 %264
    %266 = vrot.lane.b32.xlu0 %v95, 48
    %v267 = vpop.permute.xlu0 %266
    %v268 = vsel %vm102, %v265, 0
    %v270 = vsel %vm102, %v267, 0
    %272 = vmatprep.subr.mxu0 0.0
    %273 = vmatpush1.xpose.msra.mxu0 %v270
    %274 = vmatprep.subr.mxu0 0.0
    %275 = vmatpush1.xpose.msra.mxu0 0.0
    %276 = vmatprep.subr.mxu0 0.0
    %277 = vmatpush1.xpose.msra.mxu0 0.0
    %278 = vmatprep.subr.mxu0 0.0
    %279 = vmatpush1.xpose.msra.mxu0 0.0
    %280 = vmatprep.subr.mxu0 0.0
    %281 = vmatpush1.xpose.msra.mxu0 0.0
    %282 = vmatprep.subr.mxu0 0.0
    %283 = vmatpush1.xpose.msra.mxu0 0.0
    %284 = vmatprep.subr.mxu0 0.0
    %285 = vmatpush1.xpose.msra.mxu0 0.0
    %286 = vmatprep.subr.mxu0 0.0
    %287 = vmatpush1.xpose.msra.mxu0 0.0
    %288 = vmatprep.subr.mxu0 0.0
    %289 = vmatpush1.xpose.msra.mxu0 0.0
    %290 = vmatprep.subr.mxu0 0.0
    %291 = vmatpush1.xpose.msra.mxu0 0.0
    %292 = vmatprep.subr.mxu0 0.0
    %293 = vmatpush1.xpose.msra.mxu0 0.0
    %294 = vmatprep.subr.mxu0 0.0
    %295 = vmatpush1.xpose.msra.mxu0 0.0
    %296 = vmatprep.subr.mxu0 0.0
    %297 = vmatpush1.xpose.msra.mxu0 0.0
    %298 = vmatprep.subr.mxu0 0.0
    %299 = vmatpush1.xpose.msra.mxu0 0.0
    %300 = vmatprep.subr.mxu0 0.0
    %301 = vmatpush1.xpose.msra.mxu0 0.0
    %302 = vmatprep.subr.mxu0 0.0
    %303 = vmatpush1.xpose.msra.mxu0 0.0
    %304 = vmatprep.subr.mxu0 0.0
    %305 = vmatpush1.xpose.msra.mxu0 0.0
    %306 = vmatprep.subr.mxu0 0.0
    %307 = vmatpush1.xpose.msra.mxu0 0.0
    %308 = vmatprep.subr.mxu0 0.0
    %309 = vmatpush1.xpose.msra.mxu0 0.0
    %310 = vmatprep.subr.mxu0 0.0
    %311 = vmatpush1.xpose.msra.mxu0 0.0
    %312 = vmatprep.subr.mxu0 0.0
    %313 = vmatpush1.xpose.msra.mxu0 0.0
    %314 = vmatprep.subr.mxu0 0.0
    %315 = vmatpush1.xpose.msra.mxu0 0.0
    %316 = vmatprep.subr.mxu0 0.0
    %317 = vmatpush1.xpose.msra.mxu0 0.0
    %318 = vmatprep.subr.mxu0 0.0
    %319 = vmatpush1.xpose.msra.mxu0 0.0
    %320 = vmatprep.subr.mxu0 0.0
    %321 = vmatpush1.xpose.msra.mxu0 0.0
    %322 = vmatprep.subr.mxu0 0.0
    %323 = vmatpush1.xpose.msra.mxu0 0.0
    %324 = vmatprep.subr.mxu0 0.0
    %325 = vmatpush1.xpose.msra.mxu0 0.0
    %326 = vmatprep.subr.mxu0 0.0
    %327 = vmatpush1.xpose.msra.mxu0 0.0
    %328 = vmatprep.subr.mxu0 0.0
    %329 = vmatpush1.xpose.msra.mxu0 0.0
    %330 = vmatprep.subr.mxu0 0.0
    %331 = vmatpush1.xpose.msra.mxu0 0.0
    %332 = vmatprep.subr.mxu0 0.0
    %333 = vmatpush1.xpose.msra.mxu0 0.0
    %334 = vmatprep.subr.mxu0 0.0
    %335 = vmatpush1.xpose.msra.mxu0 0.0
    %336 = vmatprep.mubr.f32.mxu0 0.0
    %337 = vmatmul.mubr.f32.gmra.mrb[0].mxu0 %v268
    %v338 = vpop.f32.mrb[0].mxu0
    %v339 = vadd.f32 0.0, %v338
    %v340 = vpop.f32.mrb[0].mxu0
    %341 = vdwg.mxu0
    %v342 = vsel %vm177, %v339, -inf
    %343 = vmax.xlane.f32.xlu0 %v342
    %v344 = vpop.xlane.xlu0 %343
    %v345 = vsub.f32 %v339, %v344
    %v346 = vmul.f32 %v345, 1.442695
    %v347 = vpow.pop %v346
    %v348 = vsel %vm177, %v347, 0.0
    %349 = vadd.xlane.f32.xlu0 %v348
    %v350 = vpop.xlane.xlu0 %349
    %v351 = vrcp.pop %v350
    %v352 = vmul.f32 %v347, %v351
    %354 = vrot.lane.b32.xlu0 %v97, 112
    %v355 = vpop.permute.xlu0 %354
    %v358 = vsel %vm177, %v352, 0
    %360 = vmatprep.subr.mxu0 0.0
    %361 = vmatpush1.msra.mxu0 %v355
    %362 = vmatprep.subr.mxu0 0.0
    %363 = vmatpush1.msra.mxu0 0.0
    %364 = vmatprep.subr.mxu0 0.0
    %365 = vmatpush1.msra.mxu0 0.0
    %366 = vmatprep.subr.mxu0 0.0
    %367 = vmatpush1.msra.mxu0 0.0
    %368 = vmatprep.subr.mxu0 0.0
    %369 = vmatpush1.msra.mxu0 0.0
    %370 = vmatprep.subr.mxu0 0.0
    %371 = vmatpush1.msra.mxu0 0.0
    %372 = vmatprep.subr.mxu0 0.0
    %373 = vmatpush1.msra.mxu0 0.0
    %374 = vmatprep.subr.mxu0 0.0
    %375 = vmatpush1.msra.mxu0 0.0
    %376 = vmatprep.subr.mxu0 0.0
    %377 = vmatpush1.msra.mxu0 0.0
    %378 = vmatprep.subr.mxu0 0.0
    %379 = vmatpush1.msra.mxu0 0.0
    %380 = vmatprep.subr.mxu0 0.0
    %381 = vmatpush1.msra.mxu0 0.0
    %382 = vmatprep.subr.mxu0 0.0
    %383 = vmatpush1.msra.mxu0 0.0
    %384 = vmatprep.subr.mxu0 0.0
    %385 = vmatpush1.msra.mxu0 0.0
    %386 = vmatprep.subr.mxu0 0.0
    %387 = vmatpush1.msra.mxu0 0.0
    %388 = vmatprep.subr.mxu0 0.0
    %389 = vmatpush1.msra.mxu0 0.0
    %390 = vmatprep.subr.mxu0 0.0
    %391 = vmatpush1.msra.mxu0 0.0
    %392 = vmatprep.subr.mxu0 0.0
    %393 = vmatpush1.msra.mxu0 0.0
    %394 = vmatprep.subr.mxu0 0.0
    %395 = vmatpush1.msra.mxu0 0.0
    %396 = vmatprep.subr.mxu0 0.0
    %397 = vmatpush1.msra.mxu0 0.0
    %398 = vmatprep.subr.mxu0 0.0
    %399 = vmatpush1.msra.mxu0 0.0
    %400 = vmatprep.subr.mxu0 0.0
    %401 = vmatpush1.msra.mxu0 0.0
    %402 = vmatprep.subr.mxu0 0.0
    %403 = vmatpush1.msra.mxu0 0.0
    %404 = vmatprep.subr.mxu0 0.0
    %405 = vmatpush1.msra.mxu0 0.0
    %406 = vmatprep.subr.mxu0 0.0
    %407 = vmatpush1.msra.mxu0 0.0
    %408 = vmatprep.subr.mxu0 0.0
    %409 = vmatpush1.msra.mxu0 0.0
    %410 = vmatprep.subr.mxu0 0.0
    %411 = vmatpush1.msra.mxu0 0.0
    %412 = vmatprep.subr.mxu0 0.0
    %413 = vmatpush1.msra.mxu0 0.0
    %414 = vmatprep.subr.mxu0 0.0
    %415 = vmatpush1.msra.mxu0 0.0
    %416 = vmatprep.subr.mxu0 0.0
    %417 = vmatpush1.msra.mxu0 0.0
    %418 = vmatprep.subr.mxu0 0.0
    %419 = vmatpush1.msra.mxu0 0.0
    %420 = vmatprep.subr.mxu0 0.0
    %421 = vmatpush1.msra.mxu0 0.0
    %422 = vmatprep.subr.mxu0 0.0
    %423 = vmatpush1.msra.mxu0 0.0
    %424 = vmatprep.mubr.f32.mxu0 0.0
    %425 = vmatmul.mubr.f32.gmra.mrb[0].mxu0 %v358
    %v426 = vpop.f32.mrb[0].mxu0
    %v427 = vadd.f32 0.0, %v426
    %v428 = vpop.f32.mrb[0].mxu0
    %429 = vdwg.mxu0
    %v430 = vld [vmem:[%s2 + $0x10] sm:$0xff]
    %v431 = vld [vmem:[%s2 + $0x18] sm:$0xff]
    %v433 = vsel %vm102, %v427, 0
    %435 = vmatprep.subr.mxu0 0.0
    %436 = vmatpush1.msra.mxu0 %v430
    %437 = vmatprep.subr.mxu0 0.0
    %438 = vmatpush1.msra.mxu0 %v431
    %439 = vmatprep.subr.mxu0 0.0
    %440 = vmatpush1.msra.mxu0 0.0
    %441 = vmatprep.subr.mxu0 0.0
    %442 = vmatpush1.msra.mxu0 0.0
    %443 = vmatprep.subr.mxu0 0.0
    %444 = vmatpush1.msra.mxu0 0.0
    %445 = vmatprep.subr.mxu0 0.0
    %446 = vmatpush1.msra.mxu0 0.0
    %447 = vmatprep.subr.mxu0 0.0
    %448 = vmatpush1.msra.mxu0 0.0
    %449 = vmatprep.subr.mxu0 0.0
    %450 = vmatpush1.msra.mxu0 0.0
    %451 = vmatprep.subr.mxu0 0.0
    %452 = vmatpush1.msra.mxu0 0.0
    %453 = vmatprep.subr.mxu0 0.0
    %454 = vmatpush1.msra.mxu0 0.0
    %455 = vmatprep.subr.mxu0 0.0
    %456 = vmatpush1.msra.mxu0 0.0
    %457 = vmatprep.subr.mxu0 0.0
    %458 = vmatpush1.msra.mxu0 0.0
    %459 = vmatprep.subr.mxu0 0.0
    %460 = vmatpush1.msra.mxu0 0.0
    %461 = vmatprep.subr.mxu0 0.0
    %462 = vmatpush1.msra.mxu0 0.0
    %463 = vmatprep.subr.mxu0 0.0
    %464 = vmatpush1.msra.mxu0 0.0
    %465 = vmatprep.subr.mxu0 0.0
    %466 = vmatpush1.msra.mxu0 0.0
    %467 = vmatprep.subr.mxu0 0.0
    %468 = vmatpush1.msra.mxu0 0.0
    %469 = vmatprep.subr.mxu0 0.0
    %470 = vmatpush1.msra.mxu0 0.0
    %471 = vmatprep.subr.mxu0 0.0
    %472 = vmatpush1.msra.mxu0 0.0
    %473 = vmatprep.subr.mxu0 0.0
    %474 = vmatpush1.msra.mxu0 0.0
    %475 = vmatprep.subr.mxu0 0.0
    %476 = vmatpush1.msra.mxu0 0.0
    %477 = vmatprep.subr.mxu0 0.0
    %478 = vmatpush1.msra.mxu0 0.0
    %479 = vmatprep.subr.mxu0 0.0
    %480 = vmatpush1.msra.mxu0 0.0
    %481 = vmatprep.subr.mxu0 0.0
    %482 = vmatpush1.msra.mxu0 0.0
    %483 = vmatprep.subr.mxu0 0.0
    %484 = vmatpush1.msra.mxu0 0.0
    %485 = vmatprep.subr.mxu0 0.0
    %486 = vmatpush1.msra.mxu0 0.0
    %487 = vmatprep.subr.mxu0 0.0
    %488 = vmatpush1.msra.mxu0 0.0
    %489 = vmatprep.subr.mxu0 0.0
    %490 = vmatpush1.msra.mxu0 0.0
    %491 = vmatprep.subr.mxu0 0.0
    %492 = vmatpush1.msra.mxu0 0.0
    %493 = vmatprep.subr.mxu0 0.0
    %494 = vmatpush1.msra.mxu0 0.0
    %495 = vmatprep.subr.mxu0 0.0
    %496 = vmatpush1.msra.mxu0 0.0
    %497 = vmatprep.subr.mxu0 0.0
    %498 = vmatpush1.msra.mxu0 0.0
    %499 = vmatprep.mubr.f32.mxu0 0.0
    %500 = vmatmul.mubr.f32.gmra.mrb[0].mxu0 %v433
    %v501 = vpop.f32.mrb[0].mxu0
    %v502 = vadd.f32 0.0, %v501
    %v503 = vpop.f32.mrb[0].mxu0
    %504 = vdwg.mxu0
    %v506 = vsel %vm102, %v259, 0
    %508 = vmatprep.subr.mxu0 0.0
    %509 = vmatpush1.msra.mxu0 %v262
    %510 = vmatprep.subr.mxu0 0.0
    %511 = vmatpush1.msra.mxu0 %v263
    %512 = vmatprep.subr.mxu0 0.0
    %513 = vmatpush1.msra.mxu0 0.0
    %514 = vmatprep.subr.mxu0 0.0
    %515 = vmatpush1.msra.mxu0 0.0
    %516 = vmatprep.subr.mxu0 0.0
    %517 = vmatpush1.msra.mxu0 0.0
    %518 = vmatprep.subr.mxu0 0.0
    %519 = vmatpush1.msra.mxu0 0.0
    %520 = vmatprep.subr.mxu0 0.0
    %521 = vmatpush1.msra.mxu0 0.0
    %522 = vmatprep.subr.mxu0 0.0
    %523 = vmatpush1.msra.mxu0 0.0
    %524 = vmatprep.subr.mxu0 0.0
    %525 = vmatpush1.msra.mxu0 0.0
    %526 = vmatprep.subr.mxu0 0.0
    %527 = vmatpush1.msra.mxu0 0.0
    %528 = vmatprep.subr.mxu0 0.0
    %529 = vmatpush1.msra.mxu0 0.0
    %530 = vmatprep.subr.mxu0 0.0
    %531 = vmatpush1.msra.mxu0 0.0
    %532 = vmatprep.subr.mxu0 0.0
    %533 = vmatpush1.msra.mxu0 0.0
    %534 = vmatprep.subr.mxu0 0.0
    %535 = vmatpush1.msra.mxu0 0.0
    %536 = vmatprep.subr.mxu0 0.0
    %537 = vmatpush1.msra.mxu0 0.0
    %538 = vmatprep.subr.mxu0 0.0
    %539 = vmatpush1.msra.mxu0 0.0
    %540 = vmatprep.subr.mxu0 0.0
    %541 = vmatpush1.msra.mxu0 0.0
    %542 = vmatprep.subr.mxu0 0.0
    %543 = vmatpush1.msra.mxu0 0.0
    %544 = vmatprep.subr.mxu0 0.0
    %545 = vmatpush1.msra.mxu0 0.0
    %546 = vmatprep.subr.mxu0 0.0
    %547 = vmatpush1.msra.mxu0 0.0
    %548 = vmatprep.subr.mxu0 0.0
    %549 = vmatpush1.msra.mxu0 0.0
    %550 = vmatprep.subr.mxu0 0.0
    %551 = vmatpush1.msra.mxu0 0.0
    %552 = vmatprep.subr.mxu0 0.0
    %553 = vmatpush1.msra.mxu0 0.0
    %554 = vmatprep.subr.mxu0 0.0
    %555 = vmatpush1.msra.mxu0 0.0
    %556 = vmatprep.subr.mxu0 0.0
    %557 = vmatpush1.msra.mxu0 0.0
    %558 = vmatprep.subr.mxu0 0.0
    %559 = vmatpush1.msra.mxu0 0.0
    %560 = vmatprep.subr.mxu0 0.0
    %561 = vmatpush1.msra.mxu0 0.0
    %562 = vmatprep.subr.mxu0 0.0
    %563 = vmatpush1.msra.mxu0 0.0
    %564 = vmatprep.subr.mxu0 0.0
    %565 = vmatpush1.msra.mxu0 0.0
    %566 = vmatprep.subr.mxu0 0.0
    %567 = vmatpush1.msra.mxu0 0.0
    %568 = vmatprep.subr.mxu0 0.0
    %569 = vmatpush1.msra.mxu0 0.0
    %570 = vmatprep.subr.mxu0 0.0
    %571 = vmatpush1.msra.mxu0 0.0
    %572 = vmatprep.mubr.f32.mxu0 0.0
    %573 = vmatmul.mubr.f32.gmra.mrb[0].mxu0 %v506
    %v574 = vpop.f32.mrb[0].mxu0
    %v575 = vadd.f32 %v502, %v574
    %v576 = vpop.f32.mrb[0].mxu0
    %577 = vdwg.mxu0
    %578 = vrot.lane.b32.xlu0 %v95, 96
    %v579 = vpop.permute.xlu0 %578
    %580 = vrot.lane.b32.xlu0 %v95, 32
    %v581 = vpop.permute.xlu0 %580
    %v582 = vsel %vm102, %v579, 0
    %v584 = vsel %vm102, %v581, 0
    %586 = vmatprep.subr.mxu0 0.0
    %587 = vmatpush1.xpose.msra.mxu0 %v584
    %588 = vmatprep.subr.mxu0 0.0
    %589 = vmatpush1.xpose.msra.mxu0 0.0
    %590 = vmatprep.subr.mxu0 0.0
    %591 = vmatpush1.xpose.msra.mxu0 0.0
    %592 = vmatprep.subr.mxu0 0.0
    %593 = vmatpush1.xpose.msra.mxu0 0.0
    %594 = vmatprep.subr.mxu0 0.0
    %595 = vmatpush1.xpose.msra.mxu0 0.0
    %596 = vmatprep.subr.mxu0 0.0
    %597 = vmatpush1.xpose.msra.mxu0 0.0
    %598 = vmatprep.subr.mxu0 0.0
    %599 = vmatpush1.xpose.msra.mxu0 0.0
    %600 = vmatprep.subr.mxu0 0.0
    %601 = vmatpush1.xpose.msra.mxu0 0.0
    %602 = vmatprep.subr.mxu0 0.0
    %603 = vmatpush1.xpose.msra.mxu0 0.0
    %604 = vmatprep.subr.mxu0 0.0
    %605 = vmatpush1.xpose.msra.mxu0 0.0
    %606 = vmatprep.subr.mxu0 0.0
    %607 = vmatpush1.xpose.msra.mxu0 0.0
    %608 = vmatprep.subr.mxu0 0.0
    %609 = vmatpush1.xpose.msra.mxu0 0.0
    %610 = vmatprep.subr.mxu0 0.0
    %611 = vmatpush1.xpose.msra.mxu0 0.0
    %612 = vmatprep.subr.mxu0 0.0
    %613 = vmatpush1.xpose.msra.mxu0 0.0
    %614 = vmatprep.subr.mxu0 0.0
    %615 = vmatpush1.xpose.msra.mxu0 0.0
    %616 = vmatprep.subr.mxu0 0.0
    %617 = vmatpush1.xpose.msra.mxu0 0.0
    %618 = vmatprep.subr.mxu0 0.0
    %619 = vmatpush1.xpose.msra.mxu0 0.0
    %620 = vmatprep.subr.mxu0 0.0
    %621 = vmatpush1.xpose.msra.mxu0 0.0
    %622 = vmatprep.subr.mxu0 0.0
    %623 = vmatpush1.xpose.msra.mxu0 0.0
    %624 = vmatprep.subr.mxu0 0.0
    %625 = vmatpush1.xpose.msra.mxu0 0.0
    %626 = vmatprep.subr.mxu0 0.0
    %627 = vmatpush1.xpose.msra.mxu0 0.0
    %628 = vmatprep.subr.mxu0 0.0
    %629 = vmatpush1.xpose.msra.mxu0 0.0
    %630 = vmatprep.subr.mxu0 0.0
    %631 = vmatpush1.xpose.msra.mxu0 0.0
    %632 = vmatprep.subr.mxu0 0.0
    %633 = vmatpush1.xpose.msra.mxu0 0.0
    %634 = vmatprep.subr.mxu0 0.0
    %635 = vmatpush1.xpose.msra.mxu0 0.0
    %636 = vmatprep.subr.mxu0 0.0
    %637 = vmatpush1.xpose.msra.mxu0 0.0
    %638 = vmatprep.subr.mxu0 0.0
    %639 = vmatpush1.xpose.msra.mxu0 0.0
    %640 = vmatprep.subr.mxu0 0.0
    %641 = vmatpush1.xpose.msra.mxu0 0.0
    %642 = vmatprep.subr.mxu0 0.0
    %643 = vmatpush1.xpose.msra.mxu0 0.0
    %644 = vmatprep.subr.mxu0 0.0
    %645 = vmatpush1.xpose.msra.mxu0 0.0
    %646 = vmatprep.subr.mxu0 0.0
    %647 = vmatpush1.xpose.msra.mxu0 0.0
    %648 = vmatprep.subr.mxu0 0.0
    %649 = vmatpush1.xpose.msra.mxu0 0.0
    %650 = vmatprep.mubr.f32.mxu0 0.0
    %651 = vmatmul.mubr.f32.gmra.mrb[0].mxu0 %v582
    %v652 = vpop.f32.mrb[0].mxu0
    %v653 = vadd.f32 0.0, %v652
    %v654 = vpop.f32.mrb[0].mxu0
    %655 = vdwg.mxu0
    %v656 = vsel %vm177, %v653, -inf
    %657 = vmax.xlane.f32.xlu0 %v656
    %v658 = vpop.xlane.xlu0 %657
    %v659 = vsub.f32 %v653, %v658
    %v660 = vmul.f32 %v659, 1.442695
    %v661 = vpow.pop %v660
    %v662 = vsel %vm177, %v661, 0.0
    %663 = vadd.xlane.f32.xlu0 %v662
    %v664 = vpop.xlane.xlu0 %663
    %v665 = vrcp.pop %v664
    %v666 = vmul.f32 %v661, %v665
    %667 = vrot.lane.b32.xlu0 %v97, 96
    %v668 = vpop.permute.xlu0 %667
    %v671 = vsel %vm177, %v666, 0
    %673 = vmatprep.subr.mxu0 0.0
    %674 = vmatpush1.msra.mxu0 %v668
    %675 = vmatprep.subr.mxu0 0.0
    %676 = vmatpush1.msra.mxu0 0.0
    %677 = vmatprep.subr.mxu0 0.0
    %678 = vmatpush1.msra.mxu0 0.0
    %679 = vmatprep.subr.mxu0 0.0
    %680 = vmatpush1.msra.mxu0 0.0
    %681 = vmatprep.subr.mxu0 0.0
    %682 = vmatpush1.msra.mxu0 0.0
    %683 = vmatprep.subr.mxu0 0.0
    %684 = vmatpush1.msra.mxu0 0.0
    %685 = vmatprep.subr.mxu0 0.0
    %686 = vmatpush1.msra.mxu0 0.0
    %687 = vmatprep.subr.mxu0 0.0
    %688 = vmatpush1.msra.mxu0 0.0
    %689 = vmatprep.subr.mxu0 0.0
    %690 = vmatpush1.msra.mxu0 0.0
    %691 = vmatprep.subr.mxu0 0.0
    %692 = vmatpush1.msra.mxu0 0.0
    %693 = vmatprep.subr.mxu0 0.0
    %694 = vmatpush1.msra.mxu0 0.0
    %695 = vmatprep.subr.mxu0 0.0
    %696 = vmatpush1.msra.mxu0 0.0
    %697 = vmatprep.subr.mxu0 0.0
    %698 = vmatpush1.msra.mxu0 0.0
    %699 = vmatprep.subr.mxu0 0.0
    %700 = vmatpush1.msra.mxu0 0.0
    %701 = vmatprep.subr.mxu0 0.0
    %702 = vmatpush1.msra.mxu0 0.0
    %703 = vmatprep.subr.mxu0 0.0
    %704 = vmatpush1.msra.mxu0 0.0
    %705 = vmatprep.subr.mxu0 0.0
    %706 = vmatpush1.msra.mxu0 0.0
    %707 = vmatprep.subr.mxu0 0.0
    %708 = vmatpush1.msra.mxu0 0.0
    %709 = vmatprep.subr.mxu0 0.0
    %710 = vmatpush1.msra.mxu0 0.0
    %711 = vmatprep.subr.mxu0 0.0
    %712 = vmatpush1.msra.mxu0 0.0
    %713 = vmatprep.subr.mxu0 0.0
    %714 = vmatpush1.msra.mxu0 0.0
    %715 = vmatprep.subr.mxu0 0.0
    %716 = vmatpush1.msra.mxu0 0.0
    %717 = vmatprep.subr.mxu0 0.0
    %718 = vmatpush1.msra.mxu0 0.0
    %719 = vmatprep.subr.mxu0 0.0
    %720 = vmatpush1.msra.mxu0 0.0
    %721 = vmatprep.subr.mxu0 0.0
    %722 = vmatpush1.msra.mxu0 0.0
    %723 = vmatprep.subr.mxu0 0.0
    %724 = vmatpush1.msra.mxu0 0.0
    %725 = vmatprep.subr.mxu0 0.0
    %726 = vmatpush1.msra.mxu0 0.0
    %727 = vmatprep.subr.mxu0 0.0
    %728 = vmatpush1.msra.mxu0 0.0
    %729 = vmatprep.subr.mxu0 0.0
    %730 = vmatpush1.msra.mxu0 0.0
    %731 = vmatprep.subr.mxu0 0.0
    %732 = vmatpush1.msra.mxu0 0.0
    %733 = vmatprep.subr.mxu0 0.0
    %734 = vmatpush1.msra.mxu0 0.0
    %735 = vmatprep.subr.mxu0 0.0
    %736 = vmatpush1.msra.mxu0 0.0
    %737 = vmatprep.mubr.f32.mxu0 0.0
    %738 = vmatmul.mubr.f32.gmra.mrb[0].mxu0 %v671
    %v739 = vpop.f32.mrb[0].mxu0
    %v740 = vadd.f32 0.0, %v739
    %v741 = vpop.f32.mrb[0].mxu0
    %742 = vdwg.mxu0
    %v743 = vld [vmem:[%s2 + $0x20] sm:$0xff]
    %v744 = vld [vmem:[%s2 + $0x28] sm:$0xff]
    %v746 = vsel %vm102, %v740, 0
    %748 = vmatprep.subr.mxu0 0.0
    %749 = vmatpush1.msra.mxu0 %v743
    %750 = vmatprep.subr.mxu0 0.0
    %751 = vmatpush1.msra.mxu0 %v744
    %752 = vmatprep.subr.mxu0 0.0
    %753 = vmatpush1.msra.mxu0 0.0
    %754 = vmatprep.subr.mxu0 0.0
    %755 = vmatpush1.msra.mxu0 0.0
    %756 = vmatprep.subr.mxu0 0.0
    %757 = vmatpush1.msra.mxu0 0.0
    %758 = vmatprep.subr.mxu0 0.0
    %759 = vmatpush1.msra.mxu0 0.0
    %760 = vmatprep.subr.mxu0 0.0
    %761 = vmatpush1.msra.mxu0 0.0
    %762 = vmatprep.subr.mxu0 0.0
    %763 = vmatpush1.msra.mxu0 0.0
    %764 = vmatprep.subr.mxu0 0.0
    %765 = vmatpush1.msra.mxu0 0.0
    %766 = vmatprep.subr.mxu0 0.0
    %767 = vmatpush1.msra.mxu0 0.0
    %768 = vmatprep.subr.mxu0 0.0
    %769 = vmatpush1.msra.mxu0 0.0
    %770 = vmatprep.subr.mxu0 0.0
    %771 = vmatpush1.msra.mxu0 0.0
    %772 = vmatprep.subr.mxu0 0.0
    %773 = vmatpush1.msra.mxu0 0.0
    %774 = vmatprep.subr.mxu0 0.0
    %775 = vmatpush1.msra.mxu0 0.0
    %776 = vmatprep.subr.mxu0 0.0
    %777 = vmatpush1.msra.mxu0 0.0
    %778 = vmatprep.subr.mxu0 0.0
    %779 = vmatpush1.msra.mxu0 0.0
    %780 = vmatprep.subr.mxu0 0.0
    %781 = vmatpush1.msra.mxu0 0.0
    %782 = vmatprep.subr.mxu0 0.0
    %783 = vmatpush1.msra.mxu0 0.0
    %784 = vmatprep.subr.mxu0 0.0
    %785 = vmatpush1.msra.mxu0 0.0
    %786 = vmatprep.subr.mxu0 0.0
    %787 = vmatpush1.msra.mxu0 0.0
    %788 = vmatprep.subr.mxu0 0.0
    %789 = vmatpush1.msra.mxu0 0.0
    %790 = vmatprep.subr.mxu0 0.0
    %791 = vmatpush1.msra.mxu0 0.0
    %792 = vmatprep.subr.mxu0 0.0
    %793 = vmatpush1.msra.mxu0 0.0
    %794 = vmatprep.subr.mxu0 0.0
    %795 = vmatpush1.msra.mxu0 0.0
    %796 = vmatprep.subr.mxu0 0.0
    %797 = vmatpush1.msra.mxu0 0.0
    %798 = vmatprep.subr.mxu0 0.0
    %799 = vmatpush1.msra.mxu0 0.0
    %800 = vmatprep.subr.mxu0 0.0
    %801 = vmatpush1.msra.mxu0 0.0
    %802 = vmatprep.subr.mxu0 0.0
    %803 = vmatpush1.msra.mxu0 0.0
    %804 = vmatprep.subr.mxu0 0.0
    %805 = vmatpush1.msra.mxu0 0.0
    %806 = vmatprep.subr.mxu0 0.0
    %807 = vmatpush1.msra.mxu0 0.0
    %808 = vmatprep.subr.mxu0 0.0
    %809 = vmatpush1.msra.mxu0 0.0
    %810 = vmatprep.subr.mxu0 0.0
    %811 = vmatpush1.msra.mxu0 0.0
    %812 = vmatprep.mubr.f32.mxu0 0.0
    %813 = vmatmul.mubr.f32.gmra.mrb[0].mxu0 %v746
    %v814 = vpop.f32.mrb[0].mxu0
    %v815 = vadd.f32 0.0, %v814
    %v816 = vpop.f32.mrb[0].mxu0
    %817 = vdwg.mxu0
    %v818 = vadd.f32 %v575, %v815
    %819 = vrot.lane.b32.xlu0 %v95, 80
    %v820 = vpop.permute.xlu0 %819
    %821 = vrot.lane.b32.xlu0 %v95, 16
    %v822 = vpop.permute.xlu0 %821
    %v823 = vsel %vm102, %v820, 0
    %v825 = vsel %vm102, %v822, 0
    %827 = vmatprep.subr.mxu0 0.0
    %828 = vmatpush1.xpose.msra.mxu0 %v825
    %829 = vmatprep.subr.mxu0 0.0
    %830 = vmatpush1.xpose.msra.mxu0 0.0
    %831 = vmatprep.subr.mxu0 0.0
    %832 = vmatpush1.xpose.msra.mxu0 0.0
    %833 = vmatprep.subr.mxu0 0.0
    %834 = vmatpush1.xpose.msra.mxu0 0.0
    %835 = vmatprep.subr.mxu0 0.0
    %836 = vmatpush1.xpose.msra.mxu0 0.0
    %837 = vmatprep.subr.mxu0 0.0
    %838 = vmatpush1.xpose.msra.mxu0 0.0
    %839 = vmatprep.subr.mxu0 0.0
    %840 = vmatpush1.xpose.msra.mxu0 0.0
    %841 = vmatprep.subr.mxu0 0.0
    %842 = vmatpush1.xpose.msra.mxu0 0.0
    %843 = vmatprep.subr.mxu0 0.0
    %844 = vmatpush1.xpose.msra.mxu0 0.0
    %845 = vmatprep.subr.mxu0 0.0
    %846 = vmatpush1.xpose.msra.mxu0 0.0
    %847 = vmatprep.subr.mxu0 0.0
    %848 = vmatpush1.xpose.msra.mxu0 0.0
    %849 = vmatprep.subr.mxu0 0.0
    %850 = vmatpush1.xpose.msra.mxu0 0.0
    %851 = vmatprep.subr.mxu0 0.0
    %852 = vmatpush1.xpose.msra.mxu0 0.0
    %853 = vmatprep.subr.mxu0 0.0
    %854 = vmatpush1.xpose.msra.mxu0 0.0
    %855 = vmatprep.subr.mxu0 0.0
    %856 = vmatpush1.xpose.msra.mxu0 0.0
    %857 = vmatprep.subr.mxu0 0.0
    %858 = vmatpush1.xpose.msra.mxu0 0.0
    %859 = vmatprep.subr.mxu0 0.0
    %860 = vmatpush1.xpose.msra.mxu0 0.0
    %861 = vmatprep.subr.mxu0 0.0
    %862 = vmatpush1.xpose.msra.mxu0 0.0
    %863 = vmatprep.subr.mxu0 0.0
    %864 = vmatpush1.xpose.msra.mxu0 0.0
    %865 = vmatprep.subr.mxu0 0.0
    %866 = vmatpush1.xpose.msra.mxu0 0.0
    %867 = vmatprep.subr.mxu0 0.0
    %868 = vmatpush1.xpose.msra.mxu0 0.0
    %869 = vmatprep.subr.mxu0 0.0
    %870 = vmatpush1.xpose.msra.mxu0 0.0
    %871 = vmatprep.subr.mxu0 0.0
    %872 = vmatpush1.xpose.msra.mxu0 0.0
    %873 = vmatprep.subr.mxu0 0.0
    %874 = vmatpush1.xpose.msra.mxu0 0.0
    %875 = vmatprep.subr.mxu0 0.0
    %876 = vmatpush1.xpose.msra.mxu0 0.0
    %877 = vmatprep.subr.mxu0 0.0
    %878 = vmatpush1.xpose.msra.mxu0 0.0
    %879 = vmatprep.subr.mxu0 0.0
    %880 = vmatpush1.xpose.msra.mxu0 0.0
    %881 = vmatprep.subr.mxu0 0.0
    %882 = vmatpush1.xpose.msra.mxu0 0.0
    %883 = vmatprep.subr.mxu0 0.0
    %884 = vmatpush1.xpose.msra.mxu0 0.0
    %885 = vmatprep.subr.mxu0 0.0
    %886 = vmatpush1.xpose.msra.mxu0 0.0
    %887 = vmatprep.subr.mxu0 0.0
    %888 = vmatpush1.xpose.msra.mxu0 0.0
    %889 = vmatprep.subr.mxu0 0.0
    %890 = vmatpush1.xpose.msra.mxu0 0.0
    %891 = vmatprep.mubr.f32.mxu0 0.0
    %892 = vmatmul.mubr.f32.gmra.mrb[0].mxu0 %v823
    %v893 = vpop.f32.mrb[0].mxu0
    %v894 = vadd.f32 0.0, %v893
    %v895 = vpop.f32.mrb[0].mxu0
    %896 = vdwg.mxu0
    %v897 = vsel %vm177, %v894, -inf
    %898 = vmax.xlane.f32.xlu0 %v897
    %v899 = vpop.xlane.xlu0 %898
    %v900 = vsub.f32 %v894, %v899
    %v901 = vmul.f32 %v900, 1.442695
    %v902 = vpow.pop %v901
    %v903 = vsel %vm177, %v902, 0.0
    %904 = vadd.xlane.f32.xlu0 %v903
    %v905 = vpop.xlane.xlu0 %904
    %v906 = vrcp.pop %v905
    %v907 = vmul.f32 %v902, %v906
    %908 = vrot.lane.b32.xlu0 %v97, 80
    %v909 = vpop.permute.xlu0 %908
    %v912 = vsel %vm177, %v907, 0
    %914 = vmatprep.subr.mxu0 0.0
    %915 = vmatpush1.msra.mxu0 %v909
    %916 = vmatprep.subr.mxu0 0.0
    %917 = vmatpush1.msra.mxu0 0.0
    %918 = vmatprep.subr.mxu0 0.0
    %919 = vmatpush1.msra.mxu0 0.0
    %920 = vmatprep.subr.mxu0 0.0
    %921 = vmatpush1.msra.mxu0 0.0
    %922 = vmatprep.subr.mxu0 0.0
    %923 = vmatpush1.msra.mxu0 0.0
    %924 = vmatprep.subr.mxu0 0.0
    %925 = vmatpush1.msra.mxu0 0.0
    %926 = vmatprep.subr.mxu0 0.0
    %927 = vmatpush1.msra.mxu0 0.0
    %928 = vmatprep.subr.mxu0 0.0
    %929 = vmatpush1.msra.mxu0 0.0
    %930 = vmatprep.subr.mxu0 0.0
    %931 = vmatpush1.msra.mxu0 0.0
    %932 = vmatprep.subr.mxu0 0.0
    %933 = vmatpush1.msra.mxu0 0.0
    %934 = vmatprep.subr.mxu0 0.0
    %935 = vmatpush1.msra.mxu0 0.0
    %936 = vmatprep.subr.mxu0 0.0
    %937 = vmatpush1.msra.mxu0 0.0
    %938 = vmatprep.subr.mxu0 0.0
    %939 = vmatpush1.msra.mxu0 0.0
    %940 = vmatprep.subr.mxu0 0.0
    %941 = vmatpush1.msra.mxu0 0.0
    %942 = vmatprep.subr.mxu0 0.0
    %943 = vmatpush1.msra.mxu0 0.0
    %944 = vmatprep.subr.mxu0 0.0
    %945 = vmatpush1.msra.mxu0 0.0
    %946 = vmatprep.subr.mxu0 0.0
    %947 = vmatpush1.msra.mxu0 0.0
    %948 = vmatprep.subr.mxu0 0.0
    %949 = vmatpush1.msra.mxu0 0.0
    %950 = vmatprep.subr.mxu0 0.0
    %951 = vmatpush1.msra.mxu0 0.0
    %952 = vmatprep.subr.mxu0 0.0
    %953 = vmatpush1.msra.mxu0 0.0
    %954 = vmatprep.subr.mxu0 0.0
    %955 = vmatpush1.msra.mxu0 0.0
    %956 = vmatprep.subr.mxu0 0.0
    %957 = vmatpush1.msra.mxu0 0.0
    %958 = vmatprep.subr.mxu0 0.0
    %959 = vmatpush1.msra.mxu0 0.0
    %960 = vmatprep.subr.mxu0 0.0
    %961 = vmatpush1.msra.mxu0 0.0
    %962 = vmatprep.subr.mxu0 0.0
    %963 = vmatpush1.msra.mxu0 0.0
    %964 = vmatprep.subr.mxu0 0.0
    %965 = vmatpush1.msra.mxu0 0.0
    %966 = vmatprep.subr.mxu0 0.0
    %967 = vmatpush1.msra.mxu0 0.0
    %968 = vmatprep.subr.mxu0 0.0
    %969 = vmatpush1.msra.mxu0 0.0
    %970 = vmatprep.subr.mxu0 0.0
    %971 = vmatpush1.msra.mxu0 0.0
    %972 = vmatprep.subr.mxu0 0.0
    %973 = vmatpush1.msra.mxu0 0.0
    %974 = vmatprep.subr.mxu0 0.0
    %975 = vmatpush1.msra.mxu0 0.0
    %976 = vmatprep.subr.mxu0 0.0
    %977 = vmatpush1.msra.mxu0 0.0
    %978 = vmatprep.mubr.f32.mxu0 0.0
    %979 = vmatmul.mubr.f32.gmra.mrb[0].mxu0 %v912
    %v980 = vpop.f32.mrb[0].mxu0
    %v981 = vadd.f32 0.0, %v980
    %v982 = vpop.f32.mrb[0].mxu0
    %983 = vdwg.mxu0
    %v984 = vld [vmem:[%s2 + $0x30] sm:$0xff]
    %v985 = vld [vmem:[%s2 + $0x38] sm:$0xff]
    %v987 = vsel %vm102, %v981, 0
    %989 = vmatprep.subr.mxu0 0.0
    %990 = vmatpush1.msra.mxu0 %v984
    %991 = vmatprep.subr.mxu0 0.0
    %992 = vmatpush1.msra.mxu0 %v985
    %993 = vmatprep.subr.mxu0 0.0
    %994 = vmatpush1.msra.mxu0 0.0
    %995 = vmatprep.subr.mxu0 0.0
    %996 = vmatpush1.msra.mxu0 0.0
    %997 = vmatprep.subr.mxu0 0.0
    %998 = vmatpush1.msra.mxu0 0.0
    %999 = vmatprep.subr.mxu0 0.0
    %1000 = vmatpush1.msra.mxu0 0.0
    %1001 = vmatprep.subr.mxu0 0.0
    %1002 = vmatpush1.msra.mxu0 0.0
    %1003 = vmatprep.subr.mxu0 0.0
    %1004 = vmatpush1.msra.mxu0 0.0
    %1005 = vmatprep.subr.mxu0 0.0
    %1006 = vmatpush1.msra.mxu0 0.0
    %1007 = vmatprep.subr.mxu0 0.0
    %1008 = vmatpush1.msra.mxu0 0.0
    %1009 = vmatprep.subr.mxu0 0.0
    %1010 = vmatpush1.msra.mxu0 0.0
    %1011 = vmatprep.subr.mxu0 0.0
    %1012 = vmatpush1.msra.mxu0 0.0
    %1013 = vmatprep.subr.mxu0 0.0
    %1014 = vmatpush1.msra.mxu0 0.0
    %1015 = vmatprep.subr.mxu0 0.0
    %1016 = vmatpush1.msra.mxu0 0.0
    %1017 = vmatprep.subr.mxu0 0.0
    %1018 = vmatpush1.msra.mxu0 0.0
    %1019 = vmatprep.subr.mxu0 0.0
    %1020 = vmatpush1.msra.mxu0 0.0
    %1021 = vmatprep.subr.mxu0 0.0
    %1022 = vmatpush1.msra.mxu0 0.0
    %1023 = vmatprep.subr.mxu0 0.0
    %1024 = vmatpush1.msra.mxu0 0.0
    %1025 = vmatprep.subr.mxu0 0.0
    %1026 = vmatpush1.msra.mxu0 0.0
    %1027 = vmatprep.subr.mxu0 0.0
    %1028 = vmatpush1.msra.mxu0 0.0
    %1029 = vmatprep.subr.mxu0 0.0
    %1030 = vmatpush1.msra.mxu0 0.0
    %1031 = vmatprep.subr.mxu0 0.0
    %1032 = vmatpush1.msra.mxu0 0.0
    %1033 = vmatprep.subr.mxu0 0.0
    %1034 = vmatpush1.msra.mxu0 0.0
    %1035 = vmatprep.subr.mxu0 0.0
    %1036 = vmatpush1.msra.mxu0 0.0
    %1037 = vmatprep.subr.mxu0 0.0
    %1038 = vmatpush1.msra.mxu0 0.0
    %1039 = vmatprep.subr.mxu0 0.0
    %1040 = vmatpush1.msra.mxu0 0.0
    %1041 = vmatprep.subr.mxu0 0.0
    %1042 = vmatpush1.msra.mxu0 0.0
    %1043 = vmatprep.subr.mxu0 0.0
    %1044 = vmatpush1.msra.mxu0 0.0
    %1045 = vmatprep.subr.mxu0 0.0
    %1046 = vmatpush1.msra.mxu0 0.0
    %1047 = vmatprep.subr.mxu0 0.0
    %1048 = vmatpush1.msra.mxu0 0.0
    %1049 = vmatprep.subr.mxu0 0.0
    %1050 = vmatpush1.msra.mxu0 0.0
    %1051 = vmatprep.subr.mxu0 0.0
    %1052 = vmatpush1.msra.mxu0 0.0
    %1053 = vmatprep.mubr.f32.mxu0 0.0
    %1054 = vmatmul.mubr.f32.gmra.mrb[0].mxu0 %v987
    %v1055 = vpop.f32.mrb[0].mxu0
    %v1056 = vadd.f32 0.0, %v1055
    %v1057 = vpop.f32.mrb[0].mxu0
    %1058 = vdwg.mxu0
    %v1059 = vadd.f32 %v818, %v1056
    %1060 = vst.msk [vmem:[#allocation2] sm:$0xff] %vm24, %v1059
    // Predicated region
    $region14: #{tpu_custom_call.1} parent=1 // pred_check
      _
    $region15: #{tpu_custom_call.1} parent=1 // pred_check_branch
      %1062 = sbr.rel (0) target = $region17
    $region16: #{tpu_custom_call.1} parent=1 // pred_region
      %s1064 = ssub.s32 128, 128
      %1065 = vsyncadd [#allocation3], %s1064
      %s1067 = sshll.u32 [#allocation2], 4
      %s1068 = int_to_ptr.vmem [resolvable:$true] %s1067
      %1070 = dma.vmem_to_hbm [thread:$0]  %s1068, 128, %s3, [#allocation3]
    $region17: #{tpu_custom_call.1} parent=1 // pred_fallthru
      _
    // Predicated region
    $region18: #{tpu_custom_call.1} parent=1 // pred_check
      _
    $region19: #{tpu_custom_call.1} parent=1 // pred_check_branch
      %1072 = sbr.rel (0) target = $region21
    $region20: #{tpu_custom_call.1} parent=1 // pred_region
      %1073 = dma.done [#allocation3], 128
    $region21: #{tpu_custom_call.1} parent=1 // pred_fallthru
      _
    %1074 = vsyncpa [#allocation3], 1

</llo_original>
